<compile_context>
chip_gen: v7x
topology: tpu7x:2x2x1
jax: 0.10.0
libtpu: 0.0.40
codegen_flags: <defaults>
</compile_context>

<pallas_src>
import jax
import jax.numpy as jnp
from jax.experimental import pallas as pl
from jax.experimental.pallas import tpu as pltpu


def _round_up(n: int, m: int) -> int:
    return ((n + m - 1) // m) * m


def _cdiv(a: int, b: int) -> int:
    return (a + b - 1) // b


# ----------------------------------------------------------------------------
# Kernel
# ----------------------------------------------------------------------------
def _chained_ndnf_kernel(x_ref, w1_ref, w23_ref, w4_ref,
                         b1_ref, b23_ref, b4_ref, o_ref):
    """x_ref: [TB, P] f32 (streamed); w*_ref: [In, Out] bf16 (resident);
    b*_ref: [1, Out] f32 (delta-scaled semi-symbolic biases, resident);
    o_ref: [TB, O2] f32."""

    def layer(act_f32, w_ref, b_ref):
        # bf16 MXU operands, f32 accumulation, f32 bias broadcast.
        z = jnp.dot(act_f32.astype(jnp.bfloat16), w_ref[...],
                    preferred_element_type=jnp.float32)
        return z + b_ref[...]

    y = jnp.tanh(layer(x_ref[...], w1_ref, b1_ref))   # conj#1 -> tanh
    y = jnp.tanh(layer(y, w23_ref, b23_ref))          # disj#1 + conj#2 (fused) -> tanh
    o_ref[...] = layer(y, w4_ref, b4_ref)             # disj#2


# ----------------------------------------------------------------------------
# Host-side parameter prep (one-time per call, all f32 math)
# ----------------------------------------------------------------------------
def _ss_bias(w, delta, conj):
    """delta * (max_j|W| - sum_j|W|) for conjunctions, negated for disjunctions."""
    aw = jnp.abs(w)
    b = jnp.max(aw, axis=1) - jnp.sum(aw, axis=1)      # [out]
    return delta * b if conj else -delta * b


def _prepare_params(w1, w2, w3, w4, deltas):
    d1, d2, d3, d4 = deltas
    b1 = _ss_bias(w1, d1, True)      # conj #1
    b2 = _ss_bias(w2, d2, False)     # disj #1
    b3 = _ss_bias(w3, d3, True)      # conj #2
    b4 = _ss_bias(w4, d4, False)     # disj #2

    # Fuse disj#1 and conj#2 (adjacent linear maps, exact in f32):
    #   (y @ W2^T + b2) @ W3^T + b3 = y @ (W3 @ W2)^T + (b3 + W3 @ b2)
    w23 = w3 @ w2                    # [C2, C1]
    b23 = b3 + w3 @ b2               # [C2]

    return dict(
        w1t=w1.T.astype(jnp.bfloat16),      # [P,  C1]
        w23t=w23.T.astype(jnp.bfloat16),    # [C1, C2]
        w4t=w4.T.astype(jnp.bfloat16),      # [C2, O2]
        b1=b1[None, :].astype(jnp.float32),
        b23=b23[None, :].astype(jnp.float32),
        b4=b4[None, :].astype(jnp.float32),
    )


# ----------------------------------------------------------------------------
# Wrapper
# ----------------------------------------------------------------------------
def chained_ndnf(x, w1, w2, w3, w4, *, deltas=(1.0, 1.0, 1.0, 1.0),
                 block_b: int = 2048):
    """x: [B, P] f32; w*: PyTorch-layout [out, in] f32. Returns [B, O2] f32."""
    B, P = x.shape
    O2 = w4.shape[0]
    p = _prepare_params(w1, w2, w3, w4, deltas)

    # Batch tiling: TB multiple of 16 (bf16 sublane packing), chosen to
    # minimize padded rows; grid kept even (>=2) when B is large enough so the
    # parallel batch axis shards across both v7x TensorCores.
    if _round_up(B, 16) <= 16:
        g = 1
    else:
        g = max(2, _cdiv(_round_up(B, 16), block_b))
        g += g % 2
    TB = _round_up(_cdiv(B, g), 16)
    B_pad = g * TB

    xp = x.astype(jnp.float32)
    if B_pad != B:
        xp = jnp.pad(xp, ((0, B_pad - B), (0, 0)))

    resident = lambda a: pl.BlockSpec(a.shape, lambda i: (0, 0))

    out = pl.pallas_call(
        _chained_ndnf_kernel,
        out_shape=jax.ShapeDtypeStruct((B_pad, O2), jnp.float32),
        grid=(g,),
        in_specs=[
            pl.BlockSpec((TB, P), lambda i: (i, 0)),   # streamed batch tiles
            resident(p["w1t"]), resident(p["w23t"]), resident(p["w4t"]),
            resident(p["b1"]), resident(p["b23"]), resident(p["b4"]),
        ],
        out_specs=pl.BlockSpec((TB, O2), lambda i: (i, 0)),
        compiler_params=pltpu.CompilerParams(
            dimension_semantics=("parallel",),         # 2-TC sharding on v7x
        ),
    )(xp, p["w1t"], p["w23t"], p["w4t"], p["b1"], p["b23"], p["b4"])

    return out[:B]


# ----------------------------------------------------------------------------
# References
# ----------------------------------------------------------------------------
def chained_ndnf_ref(x, w1, w2, w3, w4, *, deltas=(1.0, 1.0, 1.0, 1.0)):
    """Pure-JAX f32 reference mirroring the PyTorch forward (unfused)."""
    d1, d2, d3, d4 = deltas

    def semi(a, w, delta, conj):
        aw = jnp.abs(w)
        bias = jnp.max(aw, axis=1) - jnp.sum(aw, axis=1)
        if not conj:
            bias = -bias
        return a @ w.T + delta * bias[None, :]

    y = jnp.tanh(semi(x, w1, d1, True))
    y = semi(y, w2, d2, False)
    y = jnp.tanh(semi(y, w3, d3, True))
    return semi(y, w4, d4, False)


def chained_ndnf_kernel_math_ref(x, w1, w2, w3, w4, *, deltas=(1.0, 1.0, 1.0, 1.0)):
    """Emulates the kernel's exact math (fused W2/W3, bf16 matmul operands,
    f32 accumulation / bias / tanh) for a tighter numeric check."""
    p = _prepare_params(w1, w2, w3, w4, deltas)

    def mm(a, wt_bf16, b):
        return jnp.dot(a.astype(jnp.bfloat16), wt_bf16,
                       preferred_element_type=jnp.float32) + b

    y = jnp.tanh(mm(x, p["w1t"], p["b1"]))
    y = jnp.tanh(mm(y, p["w23t"], p["b23"]))
    return mm(y, p["w4t"], p["b4"])


if __name__ == "__main__":
    key = jax.random.PRNGKey(0)
    kx, k1, k2, k3, k4, kx2 = jax.random.split(key, 6)

    # Shapes consistent with the module:
    #   sub_ndnf:      P=32 predicates -> C1=64 conjuncts -> O1=16 outputs
    #   sub_ndnf_disj: O1=16 inputs    -> C2=32 conjuncts -> O2=8 outputs
    B, P, C1, O1, C2, O2 = 8, 32, 64, 16, 32, 8

    x = jax.random.normal(kx, (B, P), dtype=jnp.float32)
    w1 = 0.1 * jax.random.normal(k1, (C1, P), dtype=jnp.float32)
    w2 = 0.1 * jax.random.normal(k2, (O1, C1), dtype=jnp.float32)
    w3 = 0.1 * jax.random.normal(k3, (C2, O1), dtype=jnp.float32)
    w4 = 0.1 * jax.random.normal(k4, (O2, C2), dtype=jnp.float32)

    # --- small-batch run (module's natural toy shape, grid=(1,)) ---
    out = chained_ndnf(x, w1, w2, w3, w4)
    jax.block_until_ready(out)
    assert out.shape == (B, O2)
    ref_k = chained_ndnf_kernel_math_ref(x, w1, w2, w3, w4)
    assert jnp.allclose(out, ref_k, atol=5e-3, rtol=5e-3), \
        float(jnp.max(jnp.abs(out - ref_k)))
    ref_f32 = chained_ndnf_ref(x, w1, w2, w3, w4)
    assert jnp.allclose(out, ref_f32, atol=1e-1, rtol=1e-1), \
        float(jnp.max(jnp.abs(out - ref_f32)))

    # --- larger batch exercising tiling: B=384 -> TB=192, grid=(2,), no pad ---
    B2 = 384
    x2 = jax.random.normal(kx2, (B2, P), dtype=jnp.float32)
    out2 = chained_ndnf(x2, w1, w2, w3, w4)
    jax.block_until_ready(out2)
    assert out2.shape == (B2, O2)
    ref2_k = chained_ndnf_kernel_math_ref(x2, w1, w2, w3, w4)
    assert jnp.allclose(out2, ref2_k, atol=5e-3, rtol=5e-3), \
        float(jnp.max(jnp.abs(out2 - ref2_k)))
    ref2_f32 = chained_ndnf_ref(x2, w1, w2, w3, w4)
    assert jnp.allclose(out2, ref2_f32, atol=1e-1, rtol=1e-1), \
        float(jnp.max(jnp.abs(out2 - ref2_f32)))

    print("KERNEL_OK")
</pallas_src>

<mosaic_0001>
module attributes {stable_mosaic.version = 11 : i64} {
  func.func @_chained_ndnf_kernel(%arg0: i32, %arg1: memref<16x32xf32, #tpu.memory_space<vmem>>, %arg2: memref<32x64xbf16, #tpu.memory_space<vmem>>, %arg3: memref<64x32xbf16, #tpu.memory_space<vmem>>, %arg4: memref<32x8xbf16, #tpu.memory_space<vmem>>, %arg5: memref<1x64xf32, #tpu.memory_space<vmem>>, %arg6: memref<1x32xf32, #tpu.memory_space<vmem>>, %arg7: memref<1x8xf32, #tpu.memory_space<vmem>>, %arg8: memref<16x8xf32, #tpu.memory_space<vmem>>) attributes {dimension_semantics = [#tpu.dimension_semantics<parallel>], iteration_bounds = array<i64: 1>, scalar_prefetch = 0 : i64, scratch_operands = 0 : i64, tpu.core_type = #tpu.core_type<tc>, window_params = [{transform_indices = @transform_0, window_bounds = array<i64: 16, 32>}, {pipeline_mode = #tpu.pipeline_mode<synchronous>, transform_indices = @transform_1, window_bounds = array<i64: 32, 64>}, {pipeline_mode = #tpu.pipeline_mode<synchronous>, transform_indices = @transform_2, window_bounds = array<i64: 64, 32>}, {pipeline_mode = #tpu.pipeline_mode<synchronous>, transform_indices = @transform_3, window_bounds = array<i64: 32, 8>}, {pipeline_mode = #tpu.pipeline_mode<synchronous>, transform_indices = @transform_4, window_bounds = array<i64: 1, 64>}, {pipeline_mode = #tpu.pipeline_mode<synchronous>, transform_indices = @transform_5, window_bounds = array<i64: 1, 32>}, {pipeline_mode = #tpu.pipeline_mode<synchronous>, transform_indices = @transform_6, window_bounds = array<i64: 1, 8>}, {transform_indices = @transform_7, window_bounds = array<i64: 16, 8>}]} {
    %c0 = arith.constant 0 : index
    %c0_0 = arith.constant 0 : index
    %0 = vector.load %arg1[%c0, %c0_0] : memref<16x32xf32, #tpu.memory_space<vmem>>, vector<16x32xf32>
    %1 = arith.truncf %0 : vector<16x32xf32> to vector<16x32xbf16>
    %c0_1 = arith.constant 0 : index
    %c0_2 = arith.constant 0 : index
    %2 = vector.load %arg2[%c0_1, %c0_2] : memref<32x64xbf16, #tpu.memory_space<vmem>>, vector<32x64xbf16>
    %cst = arith.constant dense<0.000000e+00> : vector<16x64xf32>
    %3 = tpu.matmul %1, %2, %cst {dimension_numbers = #tpu.dot_dimension_numbers<[1], [0], [0], [1], [0, 0, 1, 1], [], []>} : vector<16x32xbf16>, vector<32x64xbf16>, vector<16x64xf32> -> vector<16x64xf32>
    %c0_3 = arith.constant 0 : index
    %c0_4 = arith.constant 0 : index
    %4 = vector.load %arg5[%c0_3, %c0_4] : memref<1x64xf32, #tpu.memory_space<vmem>>, vector<1x64xf32>
    %5 = vector.broadcast %4 : vector<1x64xf32> to vector<16x64xf32>
    %6 = arith.addf %3, %5 : vector<16x64xf32>
    %7 = math.tanh %6 : vector<16x64xf32>
    %8 = arith.truncf %7 : vector<16x64xf32> to vector<16x64xbf16>
    %c0_5 = arith.constant 0 : index
    %c0_6 = arith.constant 0 : index
    %9 = vector.load %arg3[%c0_5, %c0_6] : memref<64x32xbf16, #tpu.memory_space<vmem>>, vector<64x32xbf16>
    %cst_7 = arith.constant dense<0.000000e+00> : vector<16x32xf32>
    %10 = tpu.matmul %8, %9, %cst_7 {dimension_numbers = #tpu.dot_dimension_numbers<[1], [0], [0], [1], [0, 0, 1, 1], [], []>} : vector<16x64xbf16>, vector<64x32xbf16>, vector<16x32xf32> -> vector<16x32xf32>
    %c0_8 = arith.constant 0 : index
    %c0_9 = arith.constant 0 : index
    %11 = vector.load %arg6[%c0_8, %c0_9] : memref<1x32xf32, #tpu.memory_space<vmem>>, vector<1x32xf32>
    %12 = vector.broadcast %11 : vector<1x32xf32> to vector<16x32xf32>
    %13 = arith.addf %10, %12 : vector<16x32xf32>
    %14 = math.tanh %13 : vector<16x32xf32>
    %15 = arith.truncf %14 : vector<16x32xf32> to vector<16x32xbf16>
    %c0_10 = arith.constant 0 : index
    %c0_11 = arith.constant 0 : index
    %16 = vector.load %arg4[%c0_10, %c0_11] : memref<32x8xbf16, #tpu.memory_space<vmem>>, vector<32x8xbf16>
    %cst_12 = arith.constant dense<0.000000e+00> : vector<16x8xf32>
    %17 = tpu.matmul %15, %16, %cst_12 {dimension_numbers = #tpu.dot_dimension_numbers<[1], [0], [0], [1], [0, 0, 1, 1], [], []>} : vector<16x32xbf16>, vector<32x8xbf16>, vector<16x8xf32> -> vector<16x8xf32>
    %c0_13 = arith.constant 0 : index
    %c0_14 = arith.constant 0 : index
    %18 = vector.load %arg7[%c0_13, %c0_14] : memref<1x8xf32, #tpu.memory_space<vmem>>, vector<1x8xf32>
    %19 = vector.broadcast %18 : vector<1x8xf32> to vector<16x8xf32>
    %20 = arith.addf %17, %19 : vector<16x8xf32>
    %c0_15 = arith.constant 0 : index
    %c0_16 = arith.constant 0 : index
    %21 = vector.load %arg8[%c0_15, %c0_16] : memref<16x8xf32, #tpu.memory_space<vmem>>, vector<16x8xf32>
    tpu.vector_store %arg8[%c0_15, %c0_16], %20 {strides = array<i32>} : memref<16x8xf32, #tpu.memory_space<vmem>>, vector<16x8xf32>,
    return
  }
  func.func @transform_0(%arg0: i32) -> (i32, i32) {
    %c0_i32 = arith.constant 0 : i32
    %c0_i32_0 = arith.constant 0 : i32
    return %arg0, %c0_i32 : i32, i32
  }
  func.func @transform_1(%arg0: i32) -> (i32, i32) {
    %c0_i32 = arith.constant 0 : i32
    %c0_i32_0 = arith.constant 0 : i32
    %c0_i32_1 = arith.constant 0 : i32
    return %c0_i32, %c0_i32_0 : i32, i32
  }
  func.func @transform_2(%arg0: i32) -> (i32, i32) {
    %c0_i32 = arith.constant 0 : i32
    %c0_i32_0 = arith.constant 0 : i32
    %c0_i32_1 = arith.constant 0 : i32
    return %c0_i32, %c0_i32_0 : i32, i32
  }
  func.func @transform_3(%arg0: i32) -> (i32, i32) {
    %c0_i32 = arith.constant 0 : i32
    %c0_i32_0 = arith.constant 0 : i32
    %c0_i32_1 = arith.constant 0 : i32
    return %c0_i32, %c0_i32_0 : i32, i32
  }
  func.func @transform_4(%arg0: i32) -> (i32, i32) {
    %c0_i32 = arith.constant 0 : i32
    %c0_i32_0 = arith.constant 0 : i32
    %c0_i32_1 = arith.constant 0 : i32
    return %c0_i32, %c0_i32_0 : i32, i32
  }
  func.func @transform_5(%arg0: i32) -> (i32, i32) {
    %c0_i32 = arith.constant 0 : i32
    %c0_i32_0 = arith.constant 0 : i32
    %c0_i32_1 = arith.constant 0 : i32
    return %c0_i32, %c0_i32_0 : i32, i32
  }
  func.func @transform_6(%arg0: i32) -> (i32, i32) {
    %c0_i32 = arith.constant 0 : i32
    %c0_i32_0 = arith.constant 0 : i32
    %c0_i32_1 = arith.constant 0 : i32
    return %c0_i32, %c0_i32_0 : i32, i32
  }
  func.func @transform_7(%arg0: i32) -> (i32, i32) {
    %c0_i32 = arith.constant 0 : i32
    %c0_i32_0 = arith.constant 0 : i32
    return %arg0, %c0_i32 : i32, i32
  }
}

</mosaic_0001>

<llo_original>
// kernel: tpu_custom_call.1
$region0: #{tpu_custom_call.1}
  #allocation0 [shape = 'u32[]', space=smem, size = 0x4, offset = 0x4, fixed_abs, tag = 'smem constant byte address 0x4 - core index']
  #allocation1 [shape = 'u32[144,128]{1,0:T(1,128)}', space=vmem, size = 0x12000, scoped, tag = 'internal scratch']
  %s0 = inlined_call_operand.vmem [shape: f32[16,32], index: 0, kind: input, shape index: {}]
  %s1 = inlined_call_operand.vmem [shape: bf16[32,64], index: 1, kind: input, shape index: {}]
  %s2 = inlined_call_operand.vmem [shape: bf16[64,32], index: 2, kind: input, shape index: {}]
  %s3 = inlined_call_operand.vmem [shape: bf16[32,8], index: 3, kind: input, shape index: {}]
  %s4 = inlined_call_operand.vmem [shape: f32[1,64], index: 4, kind: input, shape index: {}]
  %s5 = inlined_call_operand.vmem [shape: f32[1,32], index: 5, kind: input, shape index: {}]
  %s6 = inlined_call_operand.vmem [shape: f32[1,8], index: 6, kind: input, shape index: {}]
  %s7 = inlined_call_operand.vmem [shape: f32[16,8], index: 7, kind: output, shape index: {}]
  %s8 = sld [smem:[#allocation0]]
  $region38: #{tpu_custom_call.1} parent=0
    _
  %s10 = ssub.s32 1, %s8
  %s11 = scalar_select 0, %s10, %s8
  // Predicated region
  $region2: #{tpu_custom_call.1} parent=0 // pred_check
    _
  $region3: #{tpu_custom_call.1} parent=0 // pred_check_branch
    %13 = sbr.rel (0) target = $region5
  $region4: #{tpu_custom_call.1} parent=0 // pred_region
    _
  $region5: #{tpu_custom_call.1} parent=0 // pred_fallthru
    _
  // Predicated region
  $region6: #{tpu_custom_call.1} parent=0 // pred_check
    _
  $region7: #{tpu_custom_call.1} parent=0 // pred_check_branch
    %15 = sbr.rel (0) target = $region9
  $region8: #{tpu_custom_call.1} parent=0 // pred_region
    _
  $region9: #{tpu_custom_call.1} parent=0 // pred_fallthru
    _
  // Predicated region
  $region10: #{tpu_custom_call.1} parent=0 // pred_check
    _
  $region11: #{tpu_custom_call.1} parent=0 // pred_check_branch
    %17 = sbr.rel (0) target = $region13
  $region12: #{tpu_custom_call.1} parent=0 // pred_region
    _
  $region13: #{tpu_custom_call.1} parent=0 // pred_fallthru
    _
  // Predicated region
  $region14: #{tpu_custom_call.1} parent=0 // pred_check
    _
  $region15: #{tpu_custom_call.1} parent=0 // pred_check_branch
    %19 = sbr.rel (0) target = $region17
  $region16: #{tpu_custom_call.1} parent=0 // pred_region
    _
  $region17: #{tpu_custom_call.1} parent=0 // pred_fallthru
    _
  // Predicated region
  $region18: #{tpu_custom_call.1} parent=0 // pred_check
    _
  $region19: #{tpu_custom_call.1} parent=0 // pred_check_branch
    %21 = sbr.rel (0) target = $region21
  $region20: #{tpu_custom_call.1} parent=0 // pred_region
    _
  $region21: #{tpu_custom_call.1} parent=0 // pred_fallthru
    _
  // Predicated region
  $region22: #{tpu_custom_call.1} parent=0 // pred_check
    _
  $region23: #{tpu_custom_call.1} parent=0 // pred_check_branch
    %23 = sbr.rel (0) target = $region25
  $region24: #{tpu_custom_call.1} parent=0 // pred_region
    _
  $region25: #{tpu_custom_call.1} parent=0 // pred_fallthru
    _
  // Predicated region
  $region26: #{tpu_custom_call.1} parent=0 // pred_check
    _
  $region27: #{tpu_custom_call.1} parent=0 // pred_check_branch
    %25 = sbr.rel (0) target = $region29
  $region28: #{tpu_custom_call.1} parent=0 // pred_region
    _
  $region29: #{tpu_custom_call.1} parent=0 // pred_fallthru
    _
  %v27 = vld [vmem:[%s0] sm:$0xff]
  %v28 = vld [vmem:[%s0 + $0x8] sm:$0xff]
  %v29 = vpack.c.bf16 %v28, %v27
  %v30 = vld [vmem:[%s1] sm:$0xf]
  %v31 = vld [vmem:[%s1 + $0x4] sm:$0xf]
  %v32 = vld [vmem:[%s1 + $0x8] sm:$0xf]
  %v33 = vld [vmem:[%s1 + $0xc] sm:$0xf]
  %v34 = vld [vmem:[%s4] sm:$0x1]
  %v36 = vlaneseq
  %v37 = vshrl.u32 %v36, 7
  %v38 = vsub.s32 0, %v37
  %v39 = vrot.slane %v34, %v38
  %v45 = vunpack.c.l.b16 %v30
  %v46 = vunpack.c.l.b16 %v31
  %v47 = vunpack.c.l.b16 %v32
  %v48 = vunpack.c.l.b16 %v33
  %v49 = vpack.c.b16 %v46, %v45
  %v50 = vpack.c.b16 %v48, %v47
  %vm53 = vcmask 261120
  %v55 = vsel %vm53, %v29, 0
  %57 = vmatprep.subr.bf16.mxu0 0
  %58 = vmatpush1.bf16.msra.mxu0 %v49
  %59 = vmatprep.subr.bf16.mxu0 0
  %60 = vmatpush1.bf16.msra.mxu0 %v50
  %61 = vmatprep.subr.bf16.mxu0 0
  %62 = vmatpush1.bf16.msra.mxu0 0
  %63 = vmatprep.subr.bf16.mxu0 0
  %64 = vmatpush1.bf16.msra.mxu0 0
  %65 = vmatprep.subr.bf16.mxu0 0
  %66 = vmatpush1.bf16.msra.mxu0 0
  %67 = vmatprep.subr.bf16.mxu0 0
  %68 = vmatpush1.bf16.msra.mxu0 0
  %69 = vmatprep.subr.bf16.mxu0 0
  %70 = vmatpush1.bf16.msra.mxu0 0
  %71 = vmatprep.subr.bf16.mxu0 0
  %72 = vmatpush1.bf16.msra.mxu0 0
  %73 = vmatprep.subr.bf16.mxu0 0
  %74 = vmatpush1.bf16.msra.mxu0 0
  %75 = vmatprep.subr.bf16.mxu0 0
  %76 = vmatpush1.bf16.msra.mxu0 0
  %77 = vmatprep.subr.bf16.mxu0 0
  %78 = vmatpush1.bf16.msra.mxu0 0
  %79 = vmatprep.subr.bf16.mxu0 0
  %80 = vmatpush1.bf16.msra.mxu0 0
  %81 = vmatprep.subr.bf16.mxu0 0
  %82 = vmatpush1.bf16.msra.mxu0 0
  %83 = vmatprep.subr.bf16.mxu0 0
  %84 = vmatpush1.bf16.msra.mxu0 0
  %85 = vmatprep.subr.bf16.mxu0 0
  %86 = vmatpush1.bf16.msra.mxu0 0
  %87 = vmatprep.subr.bf16.mxu0 0
  %88 = vmatpush1.bf16.msra.mxu0 0
  %89 = vmatprep.mubr.bf16.mxu0 0
  %90 = vmatmul.mubr.bf16.gmra.mrb[0].mxu0 %v55
  %v91 = vpop.f32.mrb[0].mxu0
  %v92 = vadd.f32 %v39, %v91
  %v93 = vpop.f32.mrb[0].mxu0
  %v94 = vpop.f32.mrb[0].mxu0
  %v95 = vadd.f32 %v39, %v94
  %v96 = vpop.f32.mrb[0].mxu0
  %97 = vdwg.mxu0
  %v98 = vtanh.pop %v92
  %v99 = vtanh.pop %v95
  %v100 = vpack.c.bf16 %v99, %v98
  %v101 = vld [vmem:[%s2] sm:$0xf]
  %v102 = vld [vmem:[%s2 + $0x4] sm:$0xf]
  %v103 = vld [vmem:[%s2 + $0x8] sm:$0xf]
  %v104 = vld [vmem:[%s2 + $0xc] sm:$0xf]
  %v105 = vld [vmem:[%s2 + $0x10] sm:$0xf]
  %v106 = vld [vmem:[%s2 + $0x14] sm:$0xf]
  %v107 = vld [vmem:[%s2 + $0x18] sm:$0xf]
  %v108 = vld [vmem:[%s2 + $0x1c] sm:$0xf]
  %v109 = vld [vmem:[%s5] sm:$0x1]
  %v111 = vlaneseq
  %v112 = vshrl.u32 %v111, 7
  %v113 = vsub.s32 0, %v112
  %v114 = vrot.slane %v109, %v113
  %v124 = vunpack.c.l.b16 %v101
  %v125 = vunpack.c.l.b16 %v102
  %v126 = vunpack.c.l.b16 %v103
  %v127 = vunpack.c.l.b16 %v104
  %v128 = vunpack.c.l.b16 %v105
  %v129 = vunpack.c.l.b16 %v106
  %v130 = vunpack.c.l.b16 %v107
  %v131 = vunpack.c.l.b16 %v108
  %v132 = vpack.c.b16 %v125, %v124
  %v133 = vpack.c.b16 %v127, %v126
  %v134 = vpack.c.b16 %v129, %v128
  %v135 = vpack.c.b16 %v131, %v130
  %vm140 = vcmask 523264
  %v142 = vsel %vm140, %v100, 0
  %144 = vmatprep.subr.bf16.mxu0 0
  %145 = vmatpush1.bf16.msra.mxu0 %v132
  %146 = vmatprep.subr.bf16.mxu0 0
  %147 = vmatpush1.bf16.msra.mxu0 %v133
  %148 = vmatprep.subr.bf16.mxu0 0
  %149 = vmatpush1.bf16.msra.mxu0 %v134
  %150 = vmatprep.subr.bf16.mxu0 0
  %151 = vmatpush1.bf16.msra.mxu0 %v135
  %152 = vmatprep.subr.bf16.mxu0 0
  %153 = vmatpush1.bf16.msra.mxu0 0
  %154 = vmatprep.subr.bf16.mxu0 0
  %155 = vmatpush1.bf16.msra.mxu0 0
  %156 = vmatprep.subr.bf16.mxu0 0
  %157 = vmatpush1.bf16.msra.mxu0 0
  %158 = vmatprep.subr.bf16.mxu0 0
  %159 = vmatpush1.bf16.msra.mxu0 0
  %160 = vmatprep.subr.bf16.mxu0 0
  %161 = vmatpush1.bf16.msra.mxu0 0
  %162 = vmatprep.subr.bf16.mxu0 0
  %163 = vmatpush1.bf16.msra.mxu0 0
  %164 = vmatprep.subr.bf16.mxu0 0
  %165 = vmatpush1.bf16.msra.mxu0 0
  %166 = vmatprep.subr.bf16.mxu0 0
  %167 = vmatpush1.bf16.msra.mxu0 0
  %168 = vmatprep.subr.bf16.mxu0 0
  %169 = vmatpush1.bf16.msra.mxu0 0
  %170 = vmatprep.subr.bf16.mxu0 0
  %171 = vmatpush1.bf16.msra.mxu0 0
  %172 = vmatprep.subr.bf16.mxu0 0
  %173 = vmatpush1.bf16.msra.mxu0 0
  %174 = vmatprep.subr.bf16.mxu0 0
  %175 = vmatpush1.bf16.msra.mxu0 0
  %176 = vmatprep.mubr.bf16.mxu0 0
  %177 = vmatmul.mubr.bf16.gmra.mrb[0].mxu0 %v142
  %v178 = vpop.f32.mrb[0].mxu0
  %v179 = vadd.f32 %v114, %v178
  %v180 = vpop.f32.mrb[0].mxu0
  %v181 = vpop.f32.mrb[0].mxu0
  %v182 = vadd.f32 %v114, %v181
  %v183 = vpop.f32.mrb[0].mxu0
  %184 = vdwg.mxu0
  %v185 = vtanh.pop %v179
  %v186 = vtanh.pop %v182
  %v187 = vpack.c.bf16 %v186, %v185
  %v188 = vld [vmem:[%s3] sm:$0xf]
  %v189 = vld [vmem:[%s3 + $0x4] sm:$0xf]
  %v190 = vld [vmem:[%s3 + $0x8] sm:$0xf]
  %v191 = vld [vmem:[%s3 + $0xc] sm:$0xf]
  %v192 = vld [vmem:[%s6] sm:$0x1]
  %v194 = vlaneseq
  %v195 = vshrl.u32 %v194, 7
  %v196 = vsub.s32 0, %v195
  %v197 = vrot.slane %v192, %v196
  %v203 = vunpack.c.l.b16 %v188
  %v204 = vunpack.c.l.b16 %v189
  %v205 = vunpack.c.l.b16 %v190
  %v206 = vunpack.c.l.b16 %v191
  %v207 = vpack.c.b16 %v204, %v203
  %v208 = vpack.c.b16 %v206, %v205
  %v212 = vsel %vm53, %v187, 0
  %214 = vmatprep.subr.bf16.mxu0 0
  %215 = vmatpush1.bf16.msra.mxu0 %v207
  %216 = vmatprep.subr.bf16.mxu0 0
  %217 = vmatpush1.bf16.msra.mxu0 %v208
  %218 = vmatprep.subr.bf16.mxu0 0
  %219 = vmatpush1.bf16.msra.mxu0 0
  %220 = vmatprep.subr.bf16.mxu0 0
  %221 = vmatpush1.bf16.msra.mxu0 0
  %222 = vmatprep.subr.bf16.mxu0 0
  %223 = vmatpush1.bf16.msra.mxu0 0
  %224 = vmatprep.subr.bf16.mxu0 0
  %225 = vmatpush1.bf16.msra.mxu0 0
  %226 = vmatprep.subr.bf16.mxu0 0
  %227 = vmatpush1.bf16.msra.mxu0 0
  %228 = vmatprep.subr.bf16.mxu0 0
  %229 = vmatpush1.bf16.msra.mxu0 0
  %230 = vmatprep.subr.bf16.mxu0 0
  %231 = vmatpush1.bf16.msra.mxu0 0
  %232 = vmatprep.subr.bf16.mxu0 0
  %233 = vmatpush1.bf16.msra.mxu0 0
  %234 = vmatprep.subr.bf16.mxu0 0
  %235 = vmatpush1.bf16.msra.mxu0 0
  %236 = vmatprep.subr.bf16.mxu0 0
  %237 = vmatpush1.bf16.msra.mxu0 0
  %238 = vmatprep.subr.bf16.mxu0 0
  %239 = vmatpush1.bf16.msra.mxu0 0
  %240 = vmatprep.subr.bf16.mxu0 0
  %241 = vmatpush1.bf16.msra.mxu0 0
  %242 = vmatprep.subr.bf16.mxu0 0
  %243 = vmatpush1.bf16.msra.mxu0 0
  %244 = vmatprep.subr.bf16.mxu0 0
  %245 = vmatpush1.bf16.msra.mxu0 0
  %246 = vmatprep.mubr.bf16.mxu0 0
  %247 = vmatmul.mubr.bf16.gmra.mrb[0].mxu0 %v212
  %v248 = vpop.f32.mrb[0].mxu0
  %v249 = vadd.f32 %v197, %v248
  %v250 = vpop.f32.mrb[0].mxu0
  %v251 = vpop.f32.mrb[0].mxu0
  %v252 = vadd.f32 %v197, %v251
  %v253 = vpop.f32.mrb[0].mxu0
  %254 = vdwg.mxu0
  %vm255 = vcmask 64512
  %256 = vst.msk [vmem:[%s7] sm:$0xff] %vm255, %v249
  %257 = vst.msk [vmem:[%s7 + $0x8] sm:$0xff] %vm255, %v252
  // Predicated region
  $region30: #{tpu_custom_call.1} parent=0 // pred_check
    _
  $region31: #{tpu_custom_call.1} parent=0 // pred_check_branch
    %259 = sbr.rel (0) target = $region33
  $region32: #{tpu_custom_call.1} parent=0 // pred_region
    _
  $region33: #{tpu_custom_call.1} parent=0 // pred_fallthru
    _
  // Predicated region
  $region34: #{tpu_custom_call.1} parent=0 // pred_check
    _
  $region35: #{tpu_custom_call.1} parent=0 // pred_check_branch
    %261 = sbr.rel (0) target = $region37
  $region36: #{tpu_custom_call.1} parent=0 // pred_region
    _
  $region37: #{tpu_custom_call.1} parent=0 // pred_fallthru
    _

</llo_original>
